<compile_context>
chip_gen: v7x
topology: tpu7x:2x2x1
jax: 0.10.0
libtpu: 0.0.40
codegen_flags: <defaults>
</compile_context>

<pallas_src>
import functools

import jax
import jax.numpy as jnp
from jax.experimental import pallas as pl
from jax.experimental.pallas import tpu as pltpu

# Globals from the reference script (used inside hawkes_intensity).
TRAIN_TD_MEAN = 1.0
TRAIN_TD_STD = 2.0


def _round_up(x, m):
    return ((x + m - 1) // m) * m


# --------------------------------------------------------------------------- #
# Fused Pallas kernel: all Hawkes intensities for a tile of events
# --------------------------------------------------------------------------- #
def _dyrep_fused_kernel(scal_ref, w_ref, zsrc_ref, zdst_ref, znegd_ref,
                        zsd_ref, zss_ref, td_ref, out_ref, gbuf_ref):
    # scal_ref (SMEM f32[7]): [bias, psi, inv_psi, alpha, w_t, td_mean, inv_td_std]
    bias = scal_ref[0]
    psi = scal_ref[1]
    inv_psi = scal_ref[2]
    alpha = scal_ref[3]
    w_t = scal_ref[4]
    td_mean = scal_ref[5]
    inv_td_std = scal_ref[6]

    S = zsd_ref.shape[0]          # num_surv_samples (static)

    wu = w_ref[0:1, :]            # [1, D]  weights for the z_u half of omega
    wv = w_ref[1:2, :]            # [1, D]  weights for the z_v half of omega

    def row_dot(z, w_row):
        # VPU multiply + XLU lane-reduce; avoids 1-column MXU matmuls.
        return jnp.sum(z * w_row, axis=-1, keepdims=True)          # [tb, 1]

    g_u_src = row_dot(zsrc_ref[...], wu)      # z_src     . w_u   [tb, 1]
    g_v_dst = row_dot(zdst_ref[...], wv)      # z_dst     . w_v   [tb, 1]
    g_v_negd = row_dot(znegd_ref[...], wv)    # z_neg_dst . w_v   [tb, 1]

    # Assemble all 2S+2 projection columns in a VMEM scratch buffer.
    gbuf_ref[:, 0:1] = g_u_src + g_v_dst                  # positive pair
    gbuf_ref[:, 1:2] = g_u_src + g_v_negd                 # negative pair (eval)
    for s in range(S):                                    # unrolled, S is small & static
        gbuf_ref[:, 2 + s:3 + s] = g_u_src + row_dot(zsd_ref[s], wv)          # surv_u[s]
        gbuf_ref[:, 2 + S + s:3 + S + s] = row_dot(zss_ref[s], wu) + g_v_dst  # surv_v[s]

    g = gbuf_ref[...] + bias                              # [tb, 2S+2]
    g_psi = jnp.clip(g * inv_psi, -75.0, 75.0)
    # Numerically stable softplus: max(x,0) + log(1 + exp(-|x|))
    softplus = jnp.maximum(g_psi, 0.0) + jnp.log(1.0 + jnp.exp(-jnp.abs(g_psi)))
    td_norm = (td_ref[...] - td_mean) * inv_td_std        # [tb, 2S+2]
    out_ref[...] = psi * softplus + alpha * jnp.exp(-w_t * td_norm)


def fused_hawkes_pallas(scal, W, z_src, z_dst, z_neg_dst, z_sd, z_ss, td_packed):
    """scal: f32[7]; W: f32[2, D]; z_src/z_dst/z_neg_dst: f32[B, D];
    z_sd/z_ss: f32[S, B, D] (sample-major survival embeddings);
    td_packed: f32[B, 2S+2].  Returns Lambda: f32[B, 2S+2]."""
    B, D = z_src.shape
    S = z_sd.shape[0]
    ncol = 2 * S + 2

    tb = min(128, _round_up(B, 8))
    B_pad = _round_up(B, tb)
    pad = B_pad - B
    if pad:
        z_src = jnp.pad(z_src, ((0, pad), (0, 0)))
        z_dst = jnp.pad(z_dst, ((0, pad), (0, 0)))
        z_neg_dst = jnp.pad(z_neg_dst, ((0, pad), (0, 0)))
        z_sd = jnp.pad(z_sd, ((0, 0), (0, pad), (0, 0)))
        z_ss = jnp.pad(z_ss, ((0, 0), (0, pad), (0, 0)))
        td_packed = jnp.pad(td_packed, ((0, pad), (0, 0)))

    out = pl.pallas_call(
        _dyrep_fused_kernel,
        out_shape=jax.ShapeDtypeStruct((B_pad, ncol), jnp.float32),
        grid_spec=pltpu.PrefetchScalarGridSpec(
            num_scalar_prefetch=0,
            grid=(B_pad // tb,),
            in_specs=[
                pl.BlockSpec(memory_space=pltpu.MemorySpace.SMEM),   # scalar params
                pl.BlockSpec((2, D), lambda i: (0, 0)),              # packed W (resident)
                pl.BlockSpec((tb, D), lambda i: (i, 0)),             # z_src tile
                pl.BlockSpec((tb, D), lambda i: (i, 0)),             # z_dst tile
                pl.BlockSpec((tb, D), lambda i: (i, 0)),             # z_neg_dst tile
                pl.BlockSpec((S, tb, D), lambda i: (0, i, 0)),       # z_neg_dst_surv [S,tb,D]
                pl.BlockSpec((S, tb, D), lambda i: (0, i, 0)),       # z_neg_src_surv [S,tb,D]
                pl.BlockSpec((tb, ncol), lambda i: (i, 0)),          # packed time deltas
            ],
            out_specs=pl.BlockSpec((tb, ncol), lambda i: (i, 0)),
            scratch_shapes=[pltpu.VMEM((tb, ncol), jnp.float32)],
        ),
        compiler_params=pltpu.CompilerParams(dimension_semantics=("parallel",)),
    )(scal, W, z_src, z_dst, z_neg_dst, z_sd, z_ss, td_packed)
    return out[:B]


# --------------------------------------------------------------------------- #
# DyRepDecoder forward (Hawkes path) — JAX glue around the fused kernel
# --------------------------------------------------------------------------- #
def compute_intensities(params, all_embeddings, assoc, src, pos_dst, neg_dst_surv,
                        neg_src_surv, neg_dst, last_update, cur_time, *,
                        num_surv_samples):
    D = all_embeddings.shape[-1]
    S = num_surv_samples
    B = src.shape[0]
    if neg_dst is None:           # training path: neg column unused
        neg_dst = pos_dst

    w = params["omega_w"]                                  # [1, 2D] (PyTorch Linear layout)
    W = jnp.stack([w[0, :D], w[0, D:]], axis=0).astype(jnp.float32)   # [2, D]
    psi = params["psi"][0]
    scal = jnp.stack([
        params["omega_b"][0], psi, 1.0 / (psi + 1e-7), params["alpha"][0],
        params["w_t"][0], jnp.float32(TRAIN_TD_MEAN), jnp.float32(1.0 / TRAIN_TD_STD),
    ]).astype(jnp.float32)

    idx_src = assoc[src]
    idx_dst = assoc[pos_dst]
    idx_negd = assoc[neg_dst]
    idx_sd = assoc[neg_dst_surv]
    idx_ss = assoc[neg_src_surv]

    z_src = all_embeddings[idx_src].astype(jnp.float32)                    # [B, D]
    z_dst = all_embeddings[idx_dst].astype(jnp.float32)                    # [B, D]
    z_negd = all_embeddings[idx_negd].astype(jnp.float32)                  # [B, D]
    # sample-major [S, B, D] layout (no S-fold repeat of z_src / z_dst)
    z_sd = all_embeddings[idx_sd].astype(jnp.float32).reshape(B, S, D).transpose(1, 0, 2)
    z_ss = all_embeddings[idx_ss].astype(jnp.float32).reshape(B, S, D).transpose(1, 0, 2)

    lu_src = last_update[idx_src]
    lu_dst = last_update[idx_dst]
    lu_negd = last_update[idx_negd]
    lu_sd = last_update[idx_sd].reshape(B, S)
    lu_ss = last_update[idx_ss].reshape(B, S)

    td_pos = cur_time - jnp.maximum(lu_src, lu_dst)                          # [B]
    td_neg = cur_time - jnp.maximum(lu_src, lu_negd)                         # [B]
    td_su = cur_time[:, None] - jnp.maximum(lu_src[:, None], lu_sd)          # [B, S]
    td_sv = cur_time[:, None] - jnp.maximum(lu_ss, lu_dst[:, None])          # [B, S]
    td_packed = jnp.concatenate(
        [td_pos[:, None], td_neg[:, None], td_su, td_sv], axis=1
    ).astype(jnp.float32)                                                    # [B, 2S+2]

    lam = fused_hawkes_pallas(scal, W, z_src, z_dst, z_negd, z_sd, z_ss, td_packed)
    lambda_uv = lam[:, 0]
    lambda_uv_neg = lam[:, 1]
    surv_u = lam[:, 2:2 + S]                # [B, S]
    surv_v = lam[:, 2 + S:2 + 2 * S]        # [B, S]
    return lambda_uv, lambda_uv_neg, surv_u, surv_v


def dyrep_decoder_forward(params, all_embeddings, assoc, src, pos_dst, neg_dst_surv,
                          neg_src_surv, neg_dst, last_update, cur_time, *,
                          num_surv_samples, training=False):
    S = num_surv_samples
    B = src.shape[0]
    lambda_uv, lambda_uv_neg, surv_u, surv_v = compute_intensities(
        params, all_embeddings, assoc, src, pos_dst, neg_dst_surv,
        neg_src_surv, neg_dst, last_update, cur_time, num_surv_samples=S)

    loss_lambda = -jnp.sum(jnp.log(lambda_uv + 1e-10))
    loss_surv_u = jnp.sum(surv_u) / S
    loss_surv_v = jnp.sum(surv_v) / S

    cond_density = []
    if not training:
        surv = jnp.exp(-(surv_u.mean(-1) + surv_v.mean(-1)))
        cond_density = [lambda_uv * surv, lambda_uv_neg * surv]

    return loss_lambda / B, loss_surv_u / B, loss_surv_v / B, cond_density


# --------------------------------------------------------------------------- #
# Pure-JAX reference (repeat-based, mirrors the PyTorch module) for checking
# --------------------------------------------------------------------------- #
def _hawkes_intensity_ref(params, z_u, z_v, td):
    D = z_u.shape[-1]
    w = params["omega_w"]
    psi = params["psi"][0]
    g = z_u @ w[0, :D] + z_v @ w[0, D:] + params["omega_b"][0]
    g_psi = jnp.clip(g / (psi + 1e-7), -75.0, 75.0)
    softplus = jnp.maximum(g_psi, 0.0) + jnp.log(1.0 + jnp.exp(-jnp.abs(g_psi)))
    td_norm = (td - TRAIN_TD_MEAN) / TRAIN_TD_STD
    return psi * softplus + params["alpha"][0] * jnp.exp(-params["w_t"][0] * td_norm)


def dyrep_decoder_forward_ref(params, all_embeddings, assoc, src, pos_dst, neg_dst_surv,
                              neg_src_surv, neg_dst, last_update, cur_time, *,
                              num_surv_samples, training=False):
    S = num_surv_samples
    B = src.shape[0]
    z_src = all_embeddings[assoc[src]]
    z_dst = all_embeddings[assoc[pos_dst]]
    z_sd = all_embeddings[assoc[neg_dst_surv]]
    z_ss = all_embeddings[assoc[neg_src_surv]]
    lu_src = last_update[assoc[src]]
    lu_dst = last_update[assoc[pos_dst]]

    td_pos = cur_time - jnp.maximum(lu_src, lu_dst)
    td_su = jnp.repeat(cur_time, S) - jnp.maximum(jnp.repeat(lu_src, S),
                                                  last_update[assoc[neg_dst_surv]])
    td_sv = jnp.repeat(cur_time, S) - jnp.maximum(last_update[assoc[neg_src_surv]],
                                                  jnp.repeat(lu_dst, S))

    lambda_uv = _hawkes_intensity_ref(params, z_src, z_dst, td_pos)
    surv_u = _hawkes_intensity_ref(params, jnp.repeat(z_src, S, axis=0), z_sd, td_su)
    surv_v = _hawkes_intensity_ref(params, z_ss, jnp.repeat(z_dst, S, axis=0), td_sv)

    loss_lambda = -jnp.sum(jnp.log(lambda_uv + 1e-10))
    loss_surv_u = jnp.sum(surv_u) / S
    loss_surv_v = jnp.sum(surv_v) / S

    cond_density = []
    if not training:
        z_negd = all_embeddings[assoc[neg_dst]]
        td_neg = cur_time - jnp.maximum(lu_src, last_update[assoc[neg_dst]])
        lambda_uv_neg = _hawkes_intensity_ref(params, z_src, z_negd, td_neg)
        s_term = surv_u.reshape(-1, S).mean(-1) + surv_v.reshape(-1, S).mean(-1)
        surv = jnp.exp(-s_term)
        cond_density = [lambda_uv * surv, lambda_uv_neg * surv]
    return loss_lambda / B, loss_surv_u / B, loss_surv_v / B, cond_density


if __name__ == "__main__":
    key = jax.random.PRNGKey(0)
    D = 32    # embedding_dim (small stand-in for 100)
    S = 10    # num_surv_samples
    B = 8     # batch of events
    N = 50    # number of nodes

    ks = jax.random.split(key, 12)
    all_embeddings = jax.random.normal(ks[0], (N, D), dtype=jnp.float32)
    assoc = jax.random.permutation(ks[1], jnp.arange(N, dtype=jnp.int32))
    src = jax.random.randint(ks[2], (B,), 0, N, dtype=jnp.int32)
    pos_dst = jax.random.randint(ks[3], (B,), 0, N, dtype=jnp.int32)
    neg_dst_surv = jax.random.randint(ks[4], (B * S,), 0, N, dtype=jnp.int32)
    neg_src_surv = jax.random.randint(ks[5], (B * S,), 0, N, dtype=jnp.int32)
    neg_dst = jax.random.randint(ks[6], (B,), 0, N, dtype=jnp.int32)
    last_update = jax.random.uniform(ks[7], (N,), dtype=jnp.float32) * 5.0
    cur_time = 5.0 + jax.random.uniform(ks[8], (B,), dtype=jnp.float32) * 5.0

    # Deterministic parameter init (shapes from the module's __init__):
    #   omega = Linear(2D -> 1); psi = 0.5; alpha, w_t ~ U(0,1)
    bound = 1.0 / jnp.sqrt(2.0 * D)
    params = {
        "omega_w": jax.random.uniform(
            ks[9], (1, 2 * D), minval=-bound, maxval=bound, dtype=jnp.float32),
        "omega_b": jax.random.uniform(
            ks[10], (1,), minval=-bound, maxval=bound, dtype=jnp.float32),
        "psi": jnp.array([0.5], dtype=jnp.float32),
        "alpha": jax.random.uniform(ks[11], (1,), dtype=jnp.float32),
        "w_t": jax.random.uniform(jax.random.fold_in(key, 99), (1,), dtype=jnp.float32),
    }

    fwd = jax.jit(functools.partial(dyrep_decoder_forward,
                                    num_surv_samples=S, training=False))
    got = fwd(params, all_embeddings, assoc, src, pos_dst, neg_dst_surv,
              neg_src_surv, neg_dst, last_update, cur_time)
    jax.block_until_ready(got)

    want = dyrep_decoder_forward_ref(
        params, all_embeddings, assoc, src, pos_dst, neg_dst_surv,
        neg_src_surv, neg_dst, last_update, cur_time,
        num_surv_samples=S, training=False)

    # Compare losses and conditional densities against the repeat-based JAX reference.
    assert jnp.allclose(got[0], want[0], atol=1e-4, rtol=1e-4)
    assert jnp.allclose(got[1], want[1], atol=1e-4, rtol=1e-4)
    assert jnp.allclose(got[2], want[2], atol=1e-4, rtol=1e-4)
    assert jnp.allclose(got[3][0], want[3][0], atol=1e-4, rtol=1e-4)
    assert jnp.allclose(got[3][1], want[3][1], atol=1e-4, rtol=1e-4)

    print("KERNEL_OK")
</pallas_src>

<mosaic_0001>
module attributes {stable_mosaic.version = 11 : i64} {
  func.func @_dyrep_fused_kernel(%arg0: i32, %arg1: memref<7xf32, #tpu.memory_space<smem>>, %arg2: memref<2x32xf32, #tpu.memory_space<vmem>>, %arg3: memref<8x32xf32, #tpu.memory_space<vmem>>, %arg4: memref<8x32xf32, #tpu.memory_space<vmem>>, %arg5: memref<8x32xf32, #tpu.memory_space<vmem>>, %arg6: memref<10x8x32xf32, #tpu.memory_space<vmem>>, %arg7: memref<10x8x32xf32, #tpu.memory_space<vmem>>, %arg8: memref<8x22xf32, #tpu.memory_space<vmem>>, %arg9: memref<8x22xf32, #tpu.memory_space<vmem>>, %arg10: memref<8x22xf32, #tpu.memory_space<vmem>>) attributes {dimension_semantics = [#tpu.dimension_semantics<parallel>], iteration_bounds = array<i64: 1>, scalar_prefetch = 0 : i64, scratch_operands = 1 : i64, tpu.core_type = #tpu.core_type<tc>, window_params = [{transform_indices = @transform_0, window_bounds = array<i64: 7>}, {pipeline_mode = #tpu.pipeline_mode<synchronous>, transform_indices = @transform_1, window_bounds = array<i64: 2, 32>}, {transform_indices = @transform_2, window_bounds = array<i64: 8, 32>}, {transform_indices = @transform_3, window_bounds = array<i64: 8, 32>}, {transform_indices = @transform_4, window_bounds = array<i64: 8, 32>}, {transform_indices = @transform_5, window_bounds = array<i64: 10, 8, 32>}, {transform_indices = @transform_6, window_bounds = array<i64: 10, 8, 32>}, {transform_indices = @transform_7, window_bounds = array<i64: 8, 22>}, {transform_indices = @transform_8, window_bounds = array<i64: 8, 22>}]} {
    %c0 = arith.constant 0 : index
    %0 = memref.load %arg1[%c0] : memref<7xf32, #tpu.memory_space<smem>>
    %c1 = arith.constant 1 : index
    %1 = memref.load %arg1[%c1] : memref<7xf32, #tpu.memory_space<smem>>
    %c2 = arith.constant 2 : index
    %2 = memref.load %arg1[%c2] : memref<7xf32, #tpu.memory_space<smem>>
    %c3 = arith.constant 3 : index
    %3 = memref.load %arg1[%c3] : memref<7xf32, #tpu.memory_space<smem>>
    %c4 = arith.constant 4 : index
    %4 = memref.load %arg1[%c4] : memref<7xf32, #tpu.memory_space<smem>>
    %c5 = arith.constant 5 : index
    %5 = memref.load %arg1[%c5] : memref<7xf32, #tpu.memory_space<smem>>
    %c6 = arith.constant 6 : index
    %6 = memref.load %arg1[%c6] : memref<7xf32, #tpu.memory_space<smem>>
    %c0_0 = arith.constant 0 : index
    %c0_1 = arith.constant 0 : index
    %7 = vector.load %arg2[%c0_0, %c0_1] : memref<2x32xf32, #tpu.memory_space<vmem>>, vector<1x32xf32>
    %c1_2 = arith.constant 1 : index
    %c0_3 = arith.constant 0 : index
    %8 = vector.load %arg2[%c1_2, %c0_3] : memref<2x32xf32, #tpu.memory_space<vmem>>, vector<1x32xf32>
    %c0_4 = arith.constant 0 : index
    %c0_5 = arith.constant 0 : index
    %9 = vector.load %arg3[%c0_4, %c0_5] : memref<8x32xf32, #tpu.memory_space<vmem>>, vector<8x32xf32>
    %10 = vector.broadcast %7 : vector<1x32xf32> to vector<8x32xf32>
    %11 = arith.mulf %9, %10 : vector<8x32xf32>
    %cst = arith.constant dense<0.000000e+00> : vector<8xf32>
    %12 = vector.multi_reduction <add>, %11, %cst [1] : vector<8x32xf32> to vector<8xf32>
    %13 = vector.shape_cast %12 : vector<8xf32> to vector<8x1xf32>
    %c0_6 = arith.constant 0 : index
    %c0_7 = arith.constant 0 : index
    %14 = vector.load %arg4[%c0_6, %c0_7] : memref<8x32xf32, #tpu.memory_space<vmem>>, vector<8x32xf32>
    %15 = vector.broadcast %8 : vector<1x32xf32> to vector<8x32xf32>
    %16 = arith.mulf %14, %15 : vector<8x32xf32>
    %cst_8 = arith.constant dense<0.000000e+00> : vector<8xf32>
    %17 = vector.multi_reduction <add>, %16, %cst_8 [1] : vector<8x32xf32> to vector<8xf32>
    %18 = vector.shape_cast %17 : vector<8xf32> to vector<8x1xf32>
    %c0_9 = arith.constant 0 : index
    %c0_10 = arith.constant 0 : index
    %19 = vector.load %arg5[%c0_9, %c0_10] : memref<8x32xf32, #tpu.memory_space<vmem>>, vector<8x32xf32>
    %20 = vector.broadcast %8 : vector<1x32xf32> to vector<8x32xf32>
    %21 = arith.mulf %19, %20 : vector<8x32xf32>
    %cst_11 = arith.constant dense<0.000000e+00> : vector<8xf32>
    %22 = vector.multi_reduction <add>, %21, %cst_11 [1] : vector<8x32xf32> to vector<8xf32>
    %23 = vector.shape_cast %22 : vector<8xf32> to vector<8x1xf32>
    %24 = arith.addf %13, %18 : vector<8x1xf32>
    %c0_12 = arith.constant 0 : index
    %c0_13 = arith.constant 0 : index
    %25 = vector.load %arg10[%c0_12, %c0_13] : memref<8x22xf32, #tpu.memory_space<vmem>>, vector<8x1xf32>
    tpu.vector_store %arg10[%c0_12, %c0_13], %24 {strides = array<i32>} : memref<8x22xf32, #tpu.memory_space<vmem>>, vector<8x1xf32>,
    %26 = arith.addf %13, %23 : vector<8x1xf32>
    %c0_14 = arith.constant 0 : index
    %c1_15 = arith.constant 1 : index
    %27 = vector.load %arg10[%c0_14, %c1_15] : memref<8x22xf32, #tpu.memory_space<vmem>>, vector<8x1xf32>
    tpu.vector_store %arg10[%c0_14, %c1_15], %26 {strides = array<i32>} : memref<8x22xf32, #tpu.memory_space<vmem>>, vector<8x1xf32>,
    %c0_16 = arith.constant 0 : index
    %c0_17 = arith.constant 0 : index
    %c0_18 = arith.constant 0 : index
    %28 = vector.load %arg6[%c0_16, %c0_17, %c0_18] : memref<10x8x32xf32, #tpu.memory_space<vmem>>, vector<1x8x32xf32>
    %29 = vector.shape_cast %28 : vector<1x8x32xf32> to vector<8x32xf32>
    %30 = vector.broadcast %8 : vector<1x32xf32> to vector<8x32xf32>
    %31 = arith.mulf %29, %30 : vector<8x32xf32>
    %cst_19 = arith.constant dense<0.000000e+00> : vector<8xf32>
    %32 = vector.multi_reduction <add>, %31, %cst_19 [1] : vector<8x32xf32> to vector<8xf32>
    %33 = vector.shape_cast %32 : vector<8xf32> to vector<8x1xf32>
    %34 = arith.addf %13, %33 : vector<8x1xf32>
    %c0_20 = arith.constant 0 : index
    %c2_21 = arith.constant 2 : index
    %35 = vector.load %arg10[%c0_20, %c2_21] : memref<8x22xf32, #tpu.memory_space<vmem>>, vector<8x1xf32>
    tpu.vector_store %arg10[%c0_20, %c2_21], %34 {strides = array<i32>} : memref<8x22xf32, #tpu.memory_space<vmem>>, vector<8x1xf32>,
    %c0_22 = arith.constant 0 : index
    %c0_23 = arith.constant 0 : index
    %c0_24 = arith.constant 0 : index
    %36 = vector.load %arg7[%c0_22, %c0_23, %c0_24] : memref<10x8x32xf32, #tpu.memory_space<vmem>>, vector<1x8x32xf32>
    %37 = vector.shape_cast %36 : vector<1x8x32xf32> to vector<8x32xf32>
    %38 = vector.broadcast %7 : vector<1x32xf32> to vector<8x32xf32>
    %39 = arith.mulf %37, %38 : vector<8x32xf32>
    %cst_25 = arith.constant dense<0.000000e+00> : vector<8xf32>
    %40 = vector.multi_reduction <add>, %39, %cst_25 [1] : vector<8x32xf32> to vector<8xf32>
    %41 = vector.shape_cast %40 : vector<8xf32> to vector<8x1xf32>
    %42 = arith.addf %41, %18 : vector<8x1xf32>
    %c0_26 = arith.constant 0 : index
    %c12 = arith.constant 12 : index
    %43 = vector.load %arg10[%c0_26, %c12] : memref<8x22xf32, #tpu.memory_space<vmem>>, vector<8x1xf32>
    tpu.vector_store %arg10[%c0_26, %c12], %42 {strides = array<i32>} : memref<8x22xf32, #tpu.memory_space<vmem>>, vector<8x1xf32>,
    %c1_27 = arith.constant 1 : index
    %c0_28 = arith.constant 0 : index
    %c0_29 = arith.constant 0 : index
    %44 = vector.load %arg6[%c1_27, %c0_28, %c0_29] : memref<10x8x32xf32, #tpu.memory_space<vmem>>, vector<1x8x32xf32>
    %45 = vector.shape_cast %44 : vector<1x8x32xf32> to vector<8x32xf32>
    %46 = vector.broadcast %8 : vector<1x32xf32> to vector<8x32xf32>
    %47 = arith.mulf %45, %46 : vector<8x32xf32>
    %cst_30 = arith.constant dense<0.000000e+00> : vector<8xf32>
    %48 = vector.multi_reduction <add>, %47, %cst_30 [1] : vector<8x32xf32> to vector<8xf32>
    %49 = vector.shape_cast %48 : vector<8xf32> to vector<8x1xf32>
    %50 = arith.addf %13, %49 : vector<8x1xf32>
    %c0_31 = arith.constant 0 : index
    %c3_32 = arith.constant 3 : index
    %51 = vector.load %arg10[%c0_31, %c3_32] : memref<8x22xf32, #tpu.memory_space<vmem>>, vector<8x1xf32>
    tpu.vector_store %arg10[%c0_31, %c3_32], %50 {strides = array<i32>} : memref<8x22xf32, #tpu.memory_space<vmem>>, vector<8x1xf32>,
    %c1_33 = arith.constant 1 : index
    %c0_34 = arith.constant 0 : index
    %c0_35 = arith.constant 0 : index
    %52 = vector.load %arg7[%c1_33, %c0_34, %c0_35] : memref<10x8x32xf32, #tpu.memory_space<vmem>>, vector<1x8x32xf32>
    %53 = vector.shape_cast %52 : vector<1x8x32xf32> to vector<8x32xf32>
    %54 = vector.broadcast %7 : vector<1x32xf32> to vector<8x32xf32>
    %55 = arith.mulf %53, %54 : vector<8x32xf32>
    %cst_36 = arith.constant dense<0.000000e+00> : vector<8xf32>
    %56 = vector.multi_reduction <add>, %55, %cst_36 [1] : vector<8x32xf32> to vector<8xf32>
    %57 = vector.shape_cast %56 : vector<8xf32> to vector<8x1xf32>
    %58 = arith.addf %57, %18 : vector<8x1xf32>
    %c0_37 = arith.constant 0 : index
    %c13 = arith.constant 13 : index
    %59 = vector.load %arg10[%c0_37, %c13] : memref<8x22xf32, #tpu.memory_space<vmem>>, vector<8x1xf32>
    tpu.vector_store %arg10[%c0_37, %c13], %58 {strides = array<i32>} : memref<8x22xf32, #tpu.memory_space<vmem>>, vector<8x1xf32>,
    %c2_38 = arith.constant 2 : index
    %c0_39 = arith.constant 0 : index
    %c0_40 = arith.constant 0 : index
    %60 = vector.load %arg6[%c2_38, %c0_39, %c0_40] : memref<10x8x32xf32, #tpu.memory_space<vmem>>, vector<1x8x32xf32>
    %61 = vector.shape_cast %60 : vector<1x8x32xf32> to vector<8x32xf32>
    %62 = vector.broadcast %8 : vector<1x32xf32> to vector<8x32xf32>
    %63 = arith.mulf %61, %62 : vector<8x32xf32>
    %cst_41 = arith.constant dense<0.000000e+00> : vector<8xf32>
    %64 = vector.multi_reduction <add>, %63, %cst_41 [1] : vector<8x32xf32> to vector<8xf32>
    %65 = vector.shape_cast %64 : vector<8xf32> to vector<8x1xf32>
    %66 = arith.addf %13, %65 : vector<8x1xf32>
    %c0_42 = arith.constant 0 : index
    %c4_43 = arith.constant 4 : index
    %67 = vector.load %arg10[%c0_42, %c4_43] : memref<8x22xf32, #tpu.memory_space<vmem>>, vector<8x1xf32>
    tpu.vector_store %arg10[%c0_42, %c4_43], %66 {strides = array<i32>} : memref<8x22xf32, #tpu.memory_space<vmem>>, vector<8x1xf32>,
    %c2_44 = arith.constant 2 : index
    %c0_45 = arith.constant 0 : index
    %c0_46 = arith.constant 0 : index
    %68 = vector.load %arg7[%c2_44, %c0_45, %c0_46] : memref<10x8x32xf32, #tpu.memory_space<vmem>>, vector<1x8x32xf32>
    %69 = vector.shape_cast %68 : vector<1x8x32xf32> to vector<8x32xf32>
    %70 = vector.broadcast %7 : vector<1x32xf32> to vector<8x32xf32>
    %71 = arith.mulf %69, %70 : vector<8x32xf32>
    %cst_47 = arith.constant dense<0.000000e+00> : vector<8xf32>
    %72 = vector.multi_reduction <add>, %71, %cst_47 [1] : vector<8x32xf32> to vector<8xf32>
    %73 = vector.shape_cast %72 : vector<8xf32> to vector<8x1xf32>
    %74 = arith.addf %73, %18 : vector<8x1xf32>
    %c0_48 = arith.constant 0 : index
    %c14 = arith.constant 14 : index
    %75 = vector.load %arg10[%c0_48, %c14] : memref<8x22xf32, #tpu.memory_space<vmem>>, vector<8x1xf32>
    tpu.vector_store %arg10[%c0_48, %c14], %74 {strides = array<i32>} : memref<8x22xf32, #tpu.memory_space<vmem>>, vector<8x1xf32>,
    %c3_49 = arith.constant 3 : index
    %c0_50 = arith.constant 0 : index
    %c0_51 = arith.constant 0 : index
    %76 = vector.load %arg6[%c3_49, %c0_50, %c0_51] : memref<10x8x32xf32, #tpu.memory_space<vmem>>, vector<1x8x32xf32>
    %77 = vector.shape_cast %76 : vector<1x8x32xf32> to vector<8x32xf32>
    %78 = vector.broadcast %8 : vector<1x32xf32> to vector<8x32xf32>
    %79 = arith.mulf %77, %78 : vector<8x32xf32>
    %cst_52 = arith.constant dense<0.000000e+00> : vector<8xf32>
    %80 = vector.multi_reduction <add>, %79, %cst_52 [1] : vector<8x32xf32> to vector<8xf32>
    %81 = vector.shape_cast %80 : vector<8xf32> to vector<8x1xf32>
    %82 = arith.addf %13, %81 : vector<8x1xf32>
    %c0_53 = arith.constant 0 : index
    %c5_54 = arith.constant 5 : index
    %83 = vector.load %arg10[%c0_53, %c5_54] : memref<8x22xf32, #tpu.memory_space<vmem>>, vector<8x1xf32>
    tpu.vector_store %arg10[%c0_53, %c5_54], %82 {strides = array<i32>} : memref<8x22xf32, #tpu.memory_space<vmem>>, vector<8x1xf32>,
    %c3_55 = arith.constant 3 : index
    %c0_56 = arith.constant 0 : index
    %c0_57 = arith.constant 0 : index
    %84 = vector.load %arg7[%c3_55, %c0_56, %c0_57] : memref<10x8x32xf32, #tpu.memory_space<vmem>>, vector<1x8x32xf32>
    %85 = vector.shape_cast %84 : vector<1x8x32xf32> to vector<8x32xf32>
    %86 = vector.broadcast %7 : vector<1x32xf32> to vector<8x32xf32>
    %87 = arith.mulf %85, %86 : vector<8x32xf32>
    %cst_58 = arith.constant dense<0.000000e+00> : vector<8xf32>
    %88 = vector.multi_reduction <add>, %87, %cst_58 [1] : vector<8x32xf32> to vector<8xf32>
    %89 = vector.shape_cast %88 : vector<8xf32> to vector<8x1xf32>
    %90 = arith.addf %89, %18 : vector<8x1xf32>
    %c0_59 = arith.constant 0 : index
    %c15 = arith.constant 15 : index
    %91 = vector.load %arg10[%c0_59, %c15] : memref<8x22xf32, #tpu.memory_space<vmem>>, vector<8x1xf32>
    tpu.vector_store %arg10[%c0_59, %c15], %90 {strides = array<i32>} : memref<8x22xf32, #tpu.memory_space<vmem>>, vector<8x1xf32>,
    %c4_60 = arith.constant 4 : index
    %c0_61 = arith.constant 0 : index
    %c0_62 = arith.constant 0 : index
    %92 = vector.load %arg6[%c4_60, %c0_61, %c0_62] : memref<10x8x32xf32, #tpu.memory_space<vmem>>, vector<1x8x32xf32>
    %93 = vector.shape_cast %92 : vector<1x8x32xf32> to vector<8x32xf32>
    %94 = vector.broadcast %8 : vector<1x32xf32> to vector<8x32xf32>
    %95 = arith.mulf %93, %94 : vector<8x32xf32>
    %cst_63 = arith.constant dense<0.000000e+00> : vector<8xf32>
    %96 = vector.multi_reduction <add>, %95, %cst_63 [1] : vector<8x32xf32> to vector<8xf32>
    %97 = vector.shape_cast %96 : vector<8xf32> to vector<8x1xf32>
    %98 = arith.addf %13, %97 : vector<8x1xf32>
    %c0_64 = arith.constant 0 : index
    %c6_65 = arith.constant 6 : index
    %99 = vector.load %arg10[%c0_64, %c6_65] : memref<8x22xf32, #tpu.memory_space<vmem>>, vector<8x1xf32>
    tpu.vector_store %arg10[%c0_64, %c6_65], %98 {strides = array<i32>} : memref<8x22xf32, #tpu.memory_space<vmem>>, vector<8x1xf32>,
    %c4_66 = arith.constant 4 : index
    %c0_67 = arith.constant 0 : index
    %c0_68 = arith.constant 0 : index
    %100 = vector.load %arg7[%c4_66, %c0_67, %c0_68] : memref<10x8x32xf32, #tpu.memory_space<vmem>>, vector<1x8x32xf32>
    %101 = vector.shape_cast %100 : vector<1x8x32xf32> to vector<8x32xf32>
    %102 = vector.broadcast %7 : vector<1x32xf32> to vector<8x32xf32>
    %103 = arith.mulf %101, %102 : vector<8x32xf32>
    %cst_69 = arith.constant dense<0.000000e+00> : vector<8xf32>
    %104 = vector.multi_reduction <add>, %103, %cst_69 [1] : vector<8x32xf32> to vector<8xf32>
    %105 = vector.shape_cast %104 : vector<8xf32> to vector<8x1xf32>
    %106 = arith.addf %105, %18 : vector<8x1xf32>
    %c0_70 = arith.constant 0 : index
    %c16 = arith.constant 16 : index
    %107 = vector.load %arg10[%c0_70, %c16] : memref<8x22xf32, #tpu.memory_space<vmem>>, vector<8x1xf32>
    tpu.vector_store %arg10[%c0_70, %c16], %106 {strides = array<i32>} : memref<8x22xf32, #tpu.memory_space<vmem>>, vector<8x1xf32>,
    %c5_71 = arith.constant 5 : index
    %c0_72 = arith.constant 0 : index
    %c0_73 = arith.constant 0 : index
    %108 = vector.load %arg6[%c5_71, %c0_72, %c0_73] : memref<10x8x32xf32, #tpu.memory_space<vmem>>, vector<1x8x32xf32>
    %109 = vector.shape_cast %108 : vector<1x8x32xf32> to vector<8x32xf32>
    %110 = vector.broadcast %8 : vector<1x32xf32> to vector<8x32xf32>
    %111 = arith.mulf %109, %110 : vector<8x32xf32>
    %cst_74 = arith.constant dense<0.000000e+00> : vector<8xf32>
    %112 = vector.multi_reduction <add>, %111, %cst_74 [1] : vector<8x32xf32> to vector<8xf32>
    %113 = vector.shape_cast %112 : vector<8xf32> to vector<8x1xf32>
    %114 = arith.addf %13, %113 : vector<8x1xf32>
    %c0_75 = arith.constant 0 : index
    %c7 = arith.constant 7 : index
    %115 = vector.load %arg10[%c0_75, %c7] : memref<8x22xf32, #tpu.memory_space<vmem>>, vector<8x1xf32>
    tpu.vector_store %arg10[%c0_75, %c7], %114 {strides = array<i32>} : memref<8x22xf32, #tpu.memory_space<vmem>>, vector<8x1xf32>,
    %c5_76 = arith.constant 5 : index
    %c0_77 = arith.constant 0 : index
    %c0_78 = arith.constant 0 : index
    %116 = vector.load %arg7[%c5_76, %c0_77, %c0_78] : memref<10x8x32xf32, #tpu.memory_space<vmem>>, vector<1x8x32xf32>
    %117 = vector.shape_cast %116 : vector<1x8x32xf32> to vector<8x32xf32>
    %118 = vector.broadcast %7 : vector<1x32xf32> to vector<8x32xf32>
    %119 = arith.mulf %117, %118 : vector<8x32xf32>
    %cst_79 = arith.constant dense<0.000000e+00> : vector<8xf32>
    %120 = vector.multi_reduction <add>, %119, %cst_79 [1] : vector<8x32xf32> to vector<8xf32>
    %121 = vector.shape_cast %120 : vector<8xf32> to vector<8x1xf32>
    %122 = arith.addf %121, %18 : vector<8x1xf32>
    %c0_80 = arith.constant 0 : index
    %c17 = arith.constant 17 : index
    %123 = vector.load %arg10[%c0_80, %c17] : memref<8x22xf32, #tpu.memory_space<vmem>>, vector<8x1xf32>
    tpu.vector_store %arg10[%c0_80, %c17], %122 {strides = array<i32>} : memref<8x22xf32, #tpu.memory_space<vmem>>, vector<8x1xf32>,
    %c6_81 = arith.constant 6 : index
    %c0_82 = arith.constant 0 : index
    %c0_83 = arith.constant 0 : index
    %124 = vector.load %arg6[%c6_81, %c0_82, %c0_83] : memref<10x8x32xf32, #tpu.memory_space<vmem>>, vector<1x8x32xf32>
    %125 = vector.shape_cast %124 : vector<1x8x32xf32> to vector<8x32xf32>
    %126 = vector.broadcast %8 : vector<1x32xf32> to vector<8x32xf32>
    %127 = arith.mulf %125, %126 : vector<8x32xf32>
    %cst_84 = arith.constant dense<0.000000e+00> : vector<8xf32>
    %128 = vector.multi_reduction <add>, %127, %cst_84 [1] : vector<8x32xf32> to vector<8xf32>
    %129 = vector.shape_cast %128 : vector<8xf32> to vector<8x1xf32>
    %130 = arith.addf %13, %129 : vector<8x1xf32>
    %c0_85 = arith.constant 0 : index
    %c8 = arith.constant 8 : index
    %131 = vector.load %arg10[%c0_85, %c8] : memref<8x22xf32, #tpu.memory_space<vmem>>, vector<8x1xf32>
    tpu.vector_store %arg10[%c0_85, %c8], %130 {strides = array<i32>} : memref<8x22xf32, #tpu.memory_space<vmem>>, vector<8x1xf32>,
    %c6_86 = arith.constant 6 : index
    %c0_87 = arith.constant 0 : index
    %c0_88 = arith.constant 0 : index
    %132 = vector.load %arg7[%c6_86, %c0_87, %c0_88] : memref<10x8x32xf32, #tpu.memory_space<vmem>>, vector<1x8x32xf32>
    %133 = vector.shape_cast %132 : vector<1x8x32xf32> to vector<8x32xf32>
    %134 = vector.broadcast %7 : vector<1x32xf32> to vector<8x32xf32>
    %135 = arith.mulf %133, %134 : vector<8x32xf32>
    %cst_89 = arith.constant dense<0.000000e+00> : vector<8xf32>
    %136 = vector.multi_reduction <add>, %135, %cst_89 [1] : vector<8x32xf32> to vector<8xf32>
    %137 = vector.shape_cast %136 : vector<8xf32> to vector<8x1xf32>
    %138 = arith.addf %137, %18 : vector<8x1xf32>
    %c0_90 = arith.constant 0 : index
    %c18 = arith.constant 18 : index
    %139 = vector.load %arg10[%c0_90, %c18] : memref<8x22xf32, #tpu.memory_space<vmem>>, vector<8x1xf32>
    tpu.vector_store %arg10[%c0_90, %c18], %138 {strides = array<i32>} : memref<8x22xf32, #tpu.memory_space<vmem>>, vector<8x1xf32>,
    %c7_91 = arith.constant 7 : index
    %c0_92 = arith.constant 0 : index
    %c0_93 = arith.constant 0 : index
    %140 = vector.load %arg6[%c7_91, %c0_92, %c0_93] : memref<10x8x32xf32, #tpu.memory_space<vmem>>, vector<1x8x32xf32>
    %141 = vector.shape_cast %140 : vector<1x8x32xf32> to vector<8x32xf32>
    %142 = vector.broadcast %8 : vector<1x32xf32> to vector<8x32xf32>
    %143 = arith.mulf %141, %142 : vector<8x32xf32>
    %cst_94 = arith.constant dense<0.000000e+00> : vector<8xf32>
    %144 = vector.multi_reduction <add>, %143, %cst_94 [1] : vector<8x32xf32> to vector<8xf32>
    %145 = vector.shape_cast %144 : vector<8xf32> to vector<8x1xf32>
    %146 = arith.addf %13, %145 : vector<8x1xf32>
    %c0_95 = arith.constant 0 : index
    %c9 = arith.constant 9 : index
    %147 = vector.load %arg10[%c0_95, %c9] : memref<8x22xf32, #tpu.memory_space<vmem>>, vector<8x1xf32>
    tpu.vector_store %arg10[%c0_95, %c9], %146 {strides = array<i32>} : memref<8x22xf32, #tpu.memory_space<vmem>>, vector<8x1xf32>,
    %c7_96 = arith.constant 7 : index
    %c0_97 = arith.constant 0 : index
    %c0_98 = arith.constant 0 : index
    %148 = vector.load %arg7[%c7_96, %c0_97, %c0_98] : memref<10x8x32xf32, #tpu.memory_space<vmem>>, vector<1x8x32xf32>
    %149 = vector.shape_cast %148 : vector<1x8x32xf32> to vector<8x32xf32>
    %150 = vector.broadcast %7 : vector<1x32xf32> to vector<8x32xf32>
    %151 = arith.mulf %149, %150 : vector<8x32xf32>
    %cst_99 = arith.constant dense<0.000000e+00> : vector<8xf32>
    %152 = vector.multi_reduction <add>, %151, %cst_99 [1] : vector<8x32xf32> to vector<8xf32>
    %153 = vector.shape_cast %152 : vector<8xf32> to vector<8x1xf32>
    %154 = arith.addf %153, %18 : vector<8x1xf32>
    %c0_100 = arith.constant 0 : index
    %c19 = arith.constant 19 : index
    %155 = vector.load %arg10[%c0_100, %c19] : memref<8x22xf32, #tpu.memory_space<vmem>>, vector<8x1xf32>
    tpu.vector_store %arg10[%c0_100, %c19], %154 {strides = array<i32>} : memref<8x22xf32, #tpu.memory_space<vmem>>, vector<8x1xf32>,
    %c8_101 = arith.constant 8 : index
    %c0_102 = arith.constant 0 : index
    %c0_103 = arith.constant 0 : index
    %156 = vector.load %arg6[%c8_101, %c0_102, %c0_103] : memref<10x8x32xf32, #tpu.memory_space<vmem>>, vector<1x8x32xf32>
    %157 = vector.shape_cast %156 : vector<1x8x32xf32> to vector<8x32xf32>
    %158 = vector.broadcast %8 : vector<1x32xf32> to vector<8x32xf32>
    %159 = arith.mulf %157, %158 : vector<8x32xf32>
    %cst_104 = arith.constant dense<0.000000e+00> : vector<8xf32>
    %160 = vector.multi_reduction <add>, %159, %cst_104 [1] : vector<8x32xf32> to vector<8xf32>
    %161 = vector.shape_cast %160 : vector<8xf32> to vector<8x1xf32>
    %162 = arith.addf %13, %161 : vector<8x1xf32>
    %c0_105 = arith.constant 0 : index
    %c10 = arith.constant 10 : index
    %163 = vector.load %arg10[%c0_105, %c10] : memref<8x22xf32, #tpu.memory_space<vmem>>, vector<8x1xf32>
    tpu.vector_store %arg10[%c0_105, %c10], %162 {strides = array<i32>} : memref<8x22xf32, #tpu.memory_space<vmem>>, vector<8x1xf32>,
    %c8_106 = arith.constant 8 : index
    %c0_107 = arith.constant 0 : index
    %c0_108 = arith.constant 0 : index
    %164 = vector.load %arg7[%c8_106, %c0_107, %c0_108] : memref<10x8x32xf32, #tpu.memory_space<vmem>>, vector<1x8x32xf32>
    %165 = vector.shape_cast %164 : vector<1x8x32xf32> to vector<8x32xf32>
    %166 = vector.broadcast %7 : vector<1x32xf32> to vector<8x32xf32>
    %167 = arith.mulf %165, %166 : vector<8x32xf32>
    %cst_109 = arith.constant dense<0.000000e+00> : vector<8xf32>
    %168 = vector.multi_reduction <add>, %167, %cst_109 [1] : vector<8x32xf32> to vector<8xf32>
    %169 = vector.shape_cast %168 : vector<8xf32> to vector<8x1xf32>
    %170 = arith.addf %169, %18 : vector<8x1xf32>
    %c0_110 = arith.constant 0 : index
    %c20 = arith.constant 20 : index
    %171 = vector.load %arg10[%c0_110, %c20] : memref<8x22xf32, #tpu.memory_space<vmem>>, vector<8x1xf32>
    tpu.vector_store %arg10[%c0_110, %c20], %170 {strides = array<i32>} : memref<8x22xf32, #tpu.memory_space<vmem>>, vector<8x1xf32>,
    %c9_111 = arith.constant 9 : index
    %c0_112 = arith.constant 0 : index
    %c0_113 = arith.constant 0 : index
    %172 = vector.load %arg6[%c9_111, %c0_112, %c0_113] : memref<10x8x32xf32, #tpu.memory_space<vmem>>, vector<1x8x32xf32>
    %173 = vector.shape_cast %172 : vector<1x8x32xf32> to vector<8x32xf32>
    %174 = vector.broadcast %8 : vector<1x32xf32> to vector<8x32xf32>
    %175 = arith.mulf %173, %174 : vector<8x32xf32>
    %cst_114 = arith.constant dense<0.000000e+00> : vector<8xf32>
    %176 = vector.multi_reduction <add>, %175, %cst_114 [1] : vector<8x32xf32> to vector<8xf32>
    %177 = vector.shape_cast %176 : vector<8xf32> to vector<8x1xf32>
    %178 = arith.addf %13, %177 : vector<8x1xf32>
    %c0_115 = arith.constant 0 : index
    %c11 = arith.constant 11 : index
    %179 = vector.load %arg10[%c0_115, %c11] : memref<8x22xf32, #tpu.memory_space<vmem>>, vector<8x1xf32>
    tpu.vector_store %arg10[%c0_115, %c11], %178 {strides = array<i32>} : memref<8x22xf32, #tpu.memory_space<vmem>>, vector<8x1xf32>,
    %c9_116 = arith.constant 9 : index
    %c0_117 = arith.constant 0 : index
    %c0_118 = arith.constant 0 : index
    %180 = vector.load %arg7[%c9_116, %c0_117, %c0_118] : memref<10x8x32xf32, #tpu.memory_space<vmem>>, vector<1x8x32xf32>
    %181 = vector.shape_cast %180 : vector<1x8x32xf32> to vector<8x32xf32>
    %182 = vector.broadcast %7 : vector<1x32xf32> to vector<8x32xf32>
    %183 = arith.mulf %181, %182 : vector<8x32xf32>
    %cst_119 = arith.constant dense<0.000000e+00> : vector<8xf32>
    %184 = vector.multi_reduction <add>, %183, %cst_119 [1] : vector<8x32xf32> to vector<8xf32>
    %185 = vector.shape_cast %184 : vector<8xf32> to vector<8x1xf32>
    %186 = arith.addf %185, %18 : vector<8x1xf32>
    %c0_120 = arith.constant 0 : index
    %c21 = arith.constant 21 : index
    %187 = vector.load %arg10[%c0_120, %c21] : memref<8x22xf32, #tpu.memory_space<vmem>>, vector<8x1xf32>
    tpu.vector_store %arg10[%c0_120, %c21], %186 {strides = array<i32>} : memref<8x22xf32, #tpu.memory_space<vmem>>, vector<8x1xf32>,
    %c0_121 = arith.constant 0 : index
    %c0_122 = arith.constant 0 : index
    %188 = vector.load %arg10[%c0_121, %c0_122] : memref<8x22xf32, #tpu.memory_space<vmem>>, vector<8x22xf32>
    %189 = vector.broadcast %0 : f32 to vector<8x22xf32>
    %190 = arith.addf %188, %189 : vector<8x22xf32>
    %191 = vector.broadcast %2 : f32 to vector<8x22xf32>
    %192 = arith.mulf %190, %191 : vector<8x22xf32>
    %cst_123 = arith.constant -7.500000e+01 : f32
    %cst_124 = arith.constant 7.500000e+01 : f32
    %193 = vector.broadcast %cst_123 : f32 to vector<8x22xf32>
    %194 = arith.maximumf %193, %192 : vector<8x22xf32>
    %195 = vector.broadcast %cst_124 : f32 to vector<8x22xf32>
    %196 = arith.minimumf %195, %194 : vector<8x22xf32>
    %cst_125 = arith.constant 0.000000e+00 : f32
    %197 = vector.broadcast %cst_125 : f32 to vector<8x22xf32>
    %198 = arith.maximumf %196, %197 : vector<8x22xf32>
    %199 = math.absf %196 : vector<8x22xf32>
    %cst_126 = arith.constant 0.000000e+00 : f32
    %200 = vector.broadcast %cst_126 : f32 to vector<8x22xf32>
    %201 = arith.subf %200, %199 : vector<8x22xf32>
    %202 = math.exp %201 : vector<8x22xf32>
    %cst_127 = arith.constant 1.000000e+00 : f32
    %203 = vector.broadcast %cst_127 : f32 to vector<8x22xf32>
    %204 = arith.addf %203, %202 : vector<8x22xf32>
    %205 = math.log %204 : vector<8x22xf32>
    %206 = arith.addf %198, %205 : vector<8x22xf32>
    %c0_128 = arith.constant 0 : index
    %c0_129 = arith.constant 0 : index
    %207 = vector.load %arg8[%c0_128, %c0_129] : memref<8x22xf32, #tpu.memory_space<vmem>>, vector<8x22xf32>
    %208 = vector.broadcast %5 : f32 to vector<8x22xf32>
    %209 = arith.subf %207, %208 : vector<8x22xf32>
    %210 = vector.broadcast %6 : f32 to vector<8x22xf32>
    %211 = arith.mulf %209, %210 : vector<8x22xf32>
    %212 = vector.broadcast %1 : f32 to vector<8x22xf32>
    %213 = arith.mulf %212, %206 : vector<8x22xf32>
    %cst_130 = arith.constant 0.000000e+00 : f32
    %214 = arith.subf %cst_130, %4 : f32
    %215 = vector.broadcast %214 : f32 to vector<8x22xf32>
    %216 = arith.mulf %215, %211 : vector<8x22xf32>
    %217 = math.exp %216 : vector<8x22xf32>
    %218 = vector.broadcast %3 : f32 to vector<8x22xf32>
    %219 = arith.mulf %218, %217 : vector<8x22xf32>
    %220 = arith.addf %213, %219 : vector<8x22xf32>
    %c0_131 = arith.constant 0 : index
    %c0_132 = arith.constant 0 : index
    %221 = vector.load %arg9[%c0_131, %c0_132] : memref<8x22xf32, #tpu.memory_space<vmem>>, vector<8x22xf32>
    tpu.vector_store %arg9[%c0_131, %c0_132], %220 {strides = array<i32>} : memref<8x22xf32, #tpu.memory_space<vmem>>, vector<8x22xf32>,
    return
  }
  func.func @transform_0(%arg0: i32) -> i32 {
    %c0_i32 = arith.constant 0 : i32
    %c0_i32_0 = arith.constant 0 : i32
    return %c0_i32 : i32
  }
  func.func @transform_1(%arg0: i32) -> (i32, i32) {
    %c0_i32 = arith.constant 0 : i32
    %c0_i32_0 = arith.constant 0 : i32
    %c0_i32_1 = arith.constant 0 : i32
    return %c0_i32, %c0_i32_0 : i32, i32
  }
  func.func @transform_2(%arg0: i32) -> (i32, i32) {
    %c0_i32 = arith.constant 0 : i32
    %c0_i32_0 = arith.constant 0 : i32
    return %arg0, %c0_i32 : i32, i32
  }
  func.func @transform_3(%arg0: i32) -> (i32, i32) {
    %c0_i32 = arith.constant 0 : i32
    %c0_i32_0 = arith.constant 0 : i32
    return %arg0, %c0_i32 : i32, i32
  }
  func.func @transform_4(%arg0: i32) -> (i32, i32) {
    %c0_i32 = arith.constant 0 : i32
    %c0_i32_0 = arith.constant 0 : i32
    return %arg0, %c0_i32 : i32, i32
  }
  func.func @transform_5(%arg0: i32) -> (i32, i32, i32) {
    %c0_i32 = arith.constant 0 : i32
    %c0_i32_0 = arith.constant 0 : i32
    %c0_i32_1 = arith.constant 0 : i32
    return %c0_i32, %arg0, %c0_i32_0 : i32, i32, i32
  }
  func.func @transform_6(%arg0: i32) -> (i32, i32, i32) {
    %c0_i32 = arith.constant 0 : i32
    %c0_i32_0 = arith.constant 0 : i32
    %c0_i32_1 = arith.constant 0 : i32
    return %c0_i32, %arg0, %c0_i32_0 : i32, i32, i32
  }
  func.func @transform_7(%arg0: i32) -> (i32, i32) {
    %c0_i32 = arith.constant 0 : i32
    %c0_i32_0 = arith.constant 0 : i32
    return %arg0, %c0_i32 : i32, i32
  }
  func.func @transform_8(%arg0: i32) -> (i32, i32) {
    %c0_i32 = arith.constant 0 : i32
    %c0_i32_0 = arith.constant 0 : i32
    return %arg0, %c0_i32 : i32, i32
  }
}

</mosaic_0001>

<llo_original>
// kernel: dyrep_decoder_forward.1
$region0: #{dyrep_decoder_forward.1}
  #allocation0 [shape = 'u32[]', space=smem, size = 0x4, offset = 0x4, fixed_abs, tag = 'smem constant byte address 0x4 - core index']
  #allocation1 [shape = 'u32[144,128]{1,0:T(1,128)}', space=vmem, size = 0x12000, scoped, tag = 'internal scratch']
  #allocation2 [shape = 'f32[8,22]{1,0:T(8,128)}', space=vmem, size = 0x1000, scoped, tag = 'scratch operand']
  %s0 = inlined_call_operand.vmem [shape: f32[7], index: 0, kind: input, shape index: {}]
  %s1 = inlined_call_operand.vmem [shape: f32[2,32], index: 1, kind: input, shape index: {}]
  %s2 = inlined_call_operand.vmem [shape: f32[8,32], index: 2, kind: input, shape index: {}]
  %s3 = inlined_call_operand.vmem [shape: f32[8,32], index: 3, kind: input, shape index: {}]
  %s4 = inlined_call_operand.vmem [shape: f32[8,32], index: 4, kind: input, shape index: {}]
  %s5 = inlined_call_operand.vmem [shape: f32[10,8,32], index: 5, kind: input, shape index: {}]
  %s6 = inlined_call_operand.vmem [shape: f32[10,8,32], index: 6, kind: input, shape index: {}]
  %s7 = inlined_call_operand.vmem [shape: f32[8,22], index: 7, kind: input, shape index: {}]
  %s8 = inlined_call_operand.vmem [shape: f32[8,22], index: 8, kind: output, shape index: {}]
  %s9 = sld [smem:[#allocation0]]
  $region46: #{dyrep_decoder_forward.1} parent=0
    _
  %s11 = ssub.s32 1, %s9
  %s12 = scalar_select 0, %s11, %s9
  $region1: #{dyrep_decoder_forward.1} parent=0
    #allocation3 [shape = 'u8[512]{0}', space=smem, size = 0x200, scoped, tag = 'input window, operand 0, single buffered']
    #allocation4 [shape = 's32[1]{0}', space=sflag, size = 0x4, scoped, tag = 'scoped memory for dyrep_decoder_forward.1']
    %13 = vsyncpa [#allocation4], 0
    // Predicated region
    $region2: #{dyrep_decoder_forward.1} parent=1 // pred_check
      _
    $region3: #{dyrep_decoder_forward.1} parent=1 // pred_check_branch
      %15 = sbr.rel (0) target = $region5
    $region4: #{dyrep_decoder_forward.1} parent=1 // pred_region
      %s17 = ssub.s32 16, 16
      %18 = vsyncadd [#allocation4], %s17
      %s20 = sshll.u32 %s0, 4
      %s21 = int_to_ptr.vmem [resolvable:$true] %s20
      %23 = dma.vmem_to_smem %s21, 16, [#allocation3], [#allocation4]
    $region5: #{dyrep_decoder_forward.1} parent=1 // pred_fallthru
      _
    // Predicated region
    $region6: #{dyrep_decoder_forward.1} parent=1 // pred_check
      _
    $region7: #{dyrep_decoder_forward.1} parent=1 // pred_check_branch
      %25 = sbr.rel (0) target = $region9
    $region8: #{dyrep_decoder_forward.1} parent=1 // pred_region
      _
    $region9: #{dyrep_decoder_forward.1} parent=1 // pred_fallthru
      _
    // Predicated region
    $region10: #{dyrep_decoder_forward.1} parent=1 // pred_check
      _
    $region11: #{dyrep_decoder_forward.1} parent=1 // pred_check_branch
      %27 = sbr.rel (0) target = $region13
    $region12: #{dyrep_decoder_forward.1} parent=1 // pred_region
      _
    $region13: #{dyrep_decoder_forward.1} parent=1 // pred_fallthru
      _
    // Predicated region
    $region14: #{dyrep_decoder_forward.1} parent=1 // pred_check
      _
    $region15: #{dyrep_decoder_forward.1} parent=1 // pred_check_branch
      %29 = sbr.rel (0) target = $region17
    $region16: #{dyrep_decoder_forward.1} parent=1 // pred_region
      _
    $region17: #{dyrep_decoder_forward.1} parent=1 // pred_fallthru
      _
    // Predicated region
    $region18: #{dyrep_decoder_forward.1} parent=1 // pred_check
      _
    $region19: #{dyrep_decoder_forward.1} parent=1 // pred_check_branch
      %31 = sbr.rel (0) target = $region21
    $region20: #{dyrep_decoder_forward.1} parent=1 // pred_region
      _
    $region21: #{dyrep_decoder_forward.1} parent=1 // pred_fallthru
      _
    // Predicated region
    $region22: #{dyrep_decoder_forward.1} parent=1 // pred_check
      _
    $region23: #{dyrep_decoder_forward.1} parent=1 // pred_check_branch
      %33 = sbr.rel (0) target = $region25
    $region24: #{dyrep_decoder_forward.1} parent=1 // pred_region
      _
    $region25: #{dyrep_decoder_forward.1} parent=1 // pred_fallthru
      _
    // Predicated region
    $region26: #{dyrep_decoder_forward.1} parent=1 // pred_check
      _
    $region27: #{dyrep_decoder_forward.1} parent=1 // pred_check_branch
      %35 = sbr.rel (0) target = $region29
    $region28: #{dyrep_decoder_forward.1} parent=1 // pred_region
      _
    $region29: #{dyrep_decoder_forward.1} parent=1 // pred_fallthru
      _
    // Predicated region
    $region30: #{dyrep_decoder_forward.1} parent=1 // pred_check
      _
    $region31: #{dyrep_decoder_forward.1} parent=1 // pred_check_branch
      %37 = sbr.rel (0) target = $region33
    $region32: #{dyrep_decoder_forward.1} parent=1 // pred_region
      _
    $region33: #{dyrep_decoder_forward.1} parent=1 // pred_fallthru
      _
    // Predicated region
    $region34: #{dyrep_decoder_forward.1} parent=1 // pred_check
      _
    $region35: #{dyrep_decoder_forward.1} parent=1 // pred_check_branch
      %39 = sbr.rel (0) target = $region37
    $region36: #{dyrep_decoder_forward.1} parent=1 // pred_region
      %40 = dma.done [#allocation4], 16
    $region37: #{dyrep_decoder_forward.1} parent=1 // pred_fallthru
      _
    %41 = sfence
    %s42 = sld [smem:[#allocation3]]
    %s43 = sld [smem:[#allocation3 + $0x1]]
    %s44 = sld [smem:[#allocation3 + $0x2]]
    %s45 = sld [smem:[#allocation3 + $0x3]]
    %s46 = sld [smem:[#allocation3 + $0x4]]
    %s47 = sld [smem:[#allocation3 + $0x5]]
    %s48 = sld [smem:[#allocation3 + $0x6]]
    %v49 = vld [vmem:[%s1] sm:$0x1]
    %v50 = vld [vmem:[%s1 + $0x1] sm:$0x1]
    %v51 = vld [vmem:[%s2] sm:$0xff]
    %v52 = vlaneseq
    %v53 = vshrl.u32 %v52, 7
    %v54 = vsub.s32 0, %v53
    %v55 = vrot.slane %v49, %v54
    %v56 = vmul.f32 %v51, %v55
    %vm57 = vcmask 261120
    %v58 = vsel %vm57, %v56, 0.0
    %59 = vadd.xlane.f32.xlu0 %v58
    %v60 = vpop.xlane.xlu0 %59
    %v61 = vld [vmem:[%s3] sm:$0xff]
    %v62 = vlaneseq
    %v63 = vshrl.u32 %v62, 7
    %v64 = vsub.s32 0, %v63
    %v65 = vrot.slane %v50, %v64
    %v66 = vmul.f32 %v61, %v65
    %v67 = vsel %vm57, %v66, 0.0
    %68 = vadd.xlane.f32.xlu0 %v67
    %v69 = vpop.xlane.xlu0 %68
    %v70 = vld [vmem:[%s4] sm:$0xff]
    %v71 = vmul.f32 %v70, %v65
    %v72 = vsel %vm57, %v71, 0.0
    %73 = vadd.xlane.f32.xlu0 %v72
    %v74 = vpop.xlane.xlu0 %73
    %v75 = vadd.f32 %v60, %v69
    %vm76 = vcmask 7168
    %77 = vst.msk [vmem:[#allocation2] sm:$0xff] %vm76, %v75
    %v78 = vadd.f32 %v60, %v74
    %vm79 = vcmask 15368
    %80 = vst.msk [vmem:[#allocation2] sm:$0xff] %vm79, %v78
    %v81 = vld [vmem:[%s5] sm:$0xff]
    %v82 = vmul.f32 %v81, %v65
    %v83 = vsel %vm57, %v82, 0.0
    %84 = vadd.xlane.f32.xlu0 %v83
    %v85 = vpop.xlane.xlu0 %84
    %v86 = vadd.f32 %v60, %v85
    %vm87 = vcmask 23568
    %88 = vst.msk [vmem:[#allocation2] sm:$0xff] %vm87, %v86
    %v89 = vld [vmem:[%s6] sm:$0xff]
    %v90 = vmul.f32 %v89, %v55
    %v91 = vsel %vm57, %v90, 0.0
    %92 = vadd.xlane.f32.xlu0 %v91
    %v93 = vpop.xlane.xlu0 %92
    %v94 = vadd.f32 %v93, %v69
    %vm95 = vcmask 105568
    %96 = vst.msk [vmem:[#allocation2] sm:$0xff] %vm95, %v94
    %s97 = scalar_lea.vmem %s5, 8
    %v98 = vld [vmem:[%s97] sm:$0xff]
    %v99 = vmul.f32 %v98, %v65
    %v100 = vsel %vm57, %v99, 0.0
    %101 = vadd.xlane.f32.xlu0 %v100
    %v102 = vpop.xlane.xlu0 %101
    %v103 = vadd.f32 %v60, %v102
    %vm104 = vcmask 31768
    %105 = vst.msk [vmem:[#allocation2] sm:$0xff] %vm104, %v103
    %s106 = scalar_lea.vmem %s6, 8
    %v107 = vld [vmem:[%s106] sm:$0xff]
    %v108 = vmul.f32 %v107, %v55
    %v109 = vsel %vm57, %v108, 0.0
    %110 = vadd.xlane.f32.xlu0 %v109
    %v111 = vpop.xlane.xlu0 %110
    %v112 = vadd.f32 %v111, %v69
    %vm113 = vcmask 113768
    %114 = vst.msk [vmem:[#allocation2] sm:$0xff] %vm113, %v112
    %s115 = scalar_lea.vmem %s5, 16
    %v116 = vld [vmem:[%s115] sm:$0xff]
    %v117 = vmul.f32 %v116, %v65
    %v118 = vsel %vm57, %v117, 0.0
    %119 = vadd.xlane.f32.xlu0 %v118
    %v120 = vpop.xlane.xlu0 %119
    %v121 = vadd.f32 %v60, %v120
    %vm122 = vcmask 39968
    %123 = vst.msk [vmem:[#allocation2] sm:$0xff] %vm122, %v121
    %s124 = scalar_lea.vmem %s6, 16
    %v125 = vld [vmem:[%s124] sm:$0xff]
    %v126 = vmul.f32 %v125, %v55
    %v127 = vsel %vm57, %v126, 0.0
    %128 = vadd.xlane.f32.xlu0 %v127
    %v129 = vpop.xlane.xlu0 %128
    %v130 = vadd.f32 %v129, %v69
    %vm131 = vcmask 121968
    %132 = vst.msk [vmem:[#allocation2] sm:$0xff] %vm131, %v130
    %s133 = scalar_lea.vmem %s5, 24
    %v134 = vld [vmem:[%s133] sm:$0xff]
    %v135 = vmul.f32 %v134, %v65
    %v136 = vsel %vm57, %v135, 0.0
    %137 = vadd.xlane.f32.xlu0 %v136
    %v138 = vpop.xlane.xlu0 %137
    %v139 = vadd.f32 %v60, %v138
    %vm140 = vcmask 48168
    %141 = vst.msk [vmem:[#allocation2] sm:$0xff] %vm140, %v139
    %s142 = scalar_lea.vmem %s6, 24
    %v143 = vld [vmem:[%s142] sm:$0xff]
    %v144 = vmul.f32 %v143, %v55
    %v145 = vsel %vm57, %v144, 0.0
    %146 = vadd.xlane.f32.xlu0 %v145
    %v147 = vpop.xlane.xlu0 %146
    %v148 = vadd.f32 %v147, %v69
    %vm149 = vcmask 130168
    %150 = vst.msk [vmem:[#allocation2] sm:$0xff] %vm149, %v148
    %s151 = scalar_lea.vmem %s5, 32
    %v152 = vld [vmem:[%s151] sm:$0xff]
    %v153 = vmul.f32 %v152, %v65
    %v154 = vsel %vm57, %v153, 0.0
    %155 = vadd.xlane.f32.xlu0 %v154
    %v156 = vpop.xlane.xlu0 %155
    %v157 = vadd.f32 %v60, %v156
    %vm158 = vcmask 56368
    %159 = vst.msk [vmem:[#allocation2] sm:$0xff] %vm158, %v157
    %s160 = scalar_lea.vmem %s6, 32
    %v161 = vld [vmem:[%s160] sm:$0xff]
    %v162 = vmul.f32 %v161, %v55
    %v163 = vsel %vm57, %v162, 0.0
    %164 = vadd.xlane.f32.xlu0 %v163
    %v165 = vpop.xlane.xlu0 %164
    %v166 = vadd.f32 %v165, %v69
    %vm167 = vcmask 138368
    %168 = vst.msk [vmem:[#allocation2] sm:$0xff] %vm167, %v166
    %s169 = scalar_lea.vmem %s5, 40
    %v170 = vld [vmem:[%s169] sm:$0xff]
    %v171 = vmul.f32 %v170, %v65
    %v172 = vsel %vm57, %v171, 0.0
    %173 = vadd.xlane.f32.xlu0 %v172
    %v174 = vpop.xlane.xlu0 %173
    %v175 = vadd.f32 %v60, %v174
    %vm176 = vcmask 64568
    %177 = vst.msk [vmem:[#allocation2] sm:$0xff] %vm176, %v175
    %s178 = scalar_lea.vmem %s6, 40
    %v179 = vld [vmem:[%s178] sm:$0xff]
    %v180 = vmul.f32 %v179, %v55
    %v181 = vsel %vm57, %v180, 0.0
    %182 = vadd.xlane.f32.xlu0 %v181
    %v183 = vpop.xlane.xlu0 %182
    %v184 = vadd.f32 %v183, %v69
    %vm185 = vcmask 146568
    %186 = vst.msk [vmem:[#allocation2] sm:$0xff] %vm185, %v184
    %s187 = scalar_lea.vmem %s5, 48
    %v188 = vld [vmem:[%s187] sm:$0xff]
    %v189 = vmul.f32 %v188, %v65
    %v190 = vsel %vm57, %v189, 0.0
    %191 = vadd.xlane.f32.xlu0 %v190
    %v192 = vpop.xlane.xlu0 %191
    %v193 = vadd.f32 %v60, %v192
    %vm194 = vcmask 72768
    %195 = vst.msk [vmem:[#allocation2] sm:$0xff] %vm194, %v193
    %s196 = scalar_lea.vmem %s6, 48
    %v197 = vld [vmem:[%s196] sm:$0xff]
    %v198 = vmul.f32 %v197, %v55
    %v199 = vsel %vm57, %v198, 0.0
    %200 = vadd.xlane.f32.xlu0 %v199
    %v201 = vpop.xlane.xlu0 %200
    %v202 = vadd.f32 %v201, %v69
    %vm203 = vcmask 154768
    %204 = vst.msk [vmem:[#allocation2] sm:$0xff] %vm203, %v202
    %s205 = scalar_lea.vmem %s5, 56
    %v206 = vld [vmem:[%s205] sm:$0xff]
    %v207 = vmul.f32 %v206, %v65
    %v208 = vsel %vm57, %v207, 0.0
    %209 = vadd.xlane.f32.xlu0 %v208
    %v210 = vpop.xlane.xlu0 %209
    %v211 = vadd.f32 %v60, %v210
    %vm212 = vcmask 80968
    %213 = vst.msk [vmem:[#allocation2] sm:$0xff] %vm212, %v211
    %s214 = scalar_lea.vmem %s6, 56
    %v215 = vld [vmem:[%s214] sm:$0xff]
    %v216 = vmul.f32 %v215, %v55
    %v217 = vsel %vm57, %v216, 0.0
    %218 = vadd.xlane.f32.xlu0 %v217
    %v219 = vpop.xlane.xlu0 %218
    %v220 = vadd.f32 %v219, %v69
    %vm221 = vcmask 162968
    %222 = vst.msk [vmem:[#allocation2] sm:$0xff] %vm221, %v220
    %s223 = scalar_lea.vmem %s5, 64
    %v224 = vld [vmem:[%s223] sm:$0xff]
    %v225 = vmul.f32 %v224, %v65
    %v226 = vsel %vm57, %v225, 0.0
    %227 = vadd.xlane.f32.xlu0 %v226
    %v228 = vpop.xlane.xlu0 %227
    %v229 = vadd.f32 %v60, %v228
    %vm230 = vcmask 89168
    %231 = vst.msk [vmem:[#allocation2] sm:$0xff] %vm230, %v229
    %s232 = scalar_lea.vmem %s6, 64
    %v233 = vld [vmem:[%s232] sm:$0xff]
    %v234 = vmul.f32 %v233, %v55
    %v235 = vsel %vm57, %v234, 0.0
    %236 = vadd.xlane.f32.xlu0 %v235
    %v237 = vpop.xlane.xlu0 %236
    %v238 = vadd.f32 %v237, %v69
    %vm239 = vcmask 171168
    %240 = vst.msk [vmem:[#allocation2] sm:$0xff] %vm239, %v238
    %s241 = scalar_lea.vmem %s5, 72
    %v242 = vld [vmem:[%s241] sm:$0xff]
    %v243 = vmul.f32 %v242, %v65
    %v244 = vsel %vm57, %v243, 0.0
    %245 = vadd.xlane.f32.xlu0 %v244
    %v246 = vpop.xlane.xlu0 %245
    %v247 = vadd.f32 %v60, %v246
    %vm248 = vcmask 97368
    %249 = vst.msk [vmem:[#allocation2] sm:$0xff] %vm248, %v247
    %s250 = scalar_lea.vmem %s6, 72
    %v251 = vld [vmem:[%s250] sm:$0xff]
    %v252 = vmul.f32 %v251, %v55
    %v253 = vsel %vm57, %v252, 0.0
    %254 = vadd.xlane.f32.xlu0 %v253
    %v255 = vpop.xlane.xlu0 %254
    %v256 = vadd.f32 %v255, %v69
    %vm257 = vcmask 179368
    %258 = vst.msk [vmem:[#allocation2] sm:$0xff] %vm257, %v256
    %v259 = vld [vmem:[#allocation2] sm:$0xff]
    %v260 = vstv %s42
    %v261 = vadd.f32 %v259, %v260
    %v262 = vstv %s44
    %v263 = vmul.f32 %v261, %v262
    %v264 = vmax.f32 %v263, -75.0
    %v265 = vmin.f32 %v264, 75.0
    %v266 = vmax.f32 %v265, 0.0
    %v267 = vand.u32 2147483647, %v265
    %v268 = vsub.f32 0.0, %v267
    %v269 = vmul.f32 %v268, 1.442695
    %v270 = vpow.pop %v269
    %v271 = vadd.f32 %v270, 1.0
    %v272 = vlog2.pop %v271
    %v273 = vmul.f32 %v272, 0.6931472
    %v274 = vadd.f32 %v266, %v273
    %v275 = vld [vmem:[%s7] sm:$0xff]
    %v276 = vstv %s47
    %v277 = vsub.f32 %v275, %v276
    %v278 = vstv %s48
    %v279 = vmul.f32 %v277, %v278
    %v280 = vstv %s43
    %v281 = vmul.f32 %v280, %v274
    %s282 = ssub.f32 0.0, %s46
    %v283 = vstv %s282
    %v284 = vmul.f32 %v283, %v279
    %v285 = vmul.f32 %v284, 1.442695
    %v286 = vpow.pop %v285
    %v287 = vstv %s45
    %v288 = vmul.f32 %v287, %v286
    %v289 = vadd.f32 %v281, %v288
    %vm290 = vcmask 179200
    %291 = vst.msk [vmem:[%s8] sm:$0xff] %vm290, %v289
    // Predicated region
    $region38: #{dyrep_decoder_forward.1} parent=1 // pred_check
      _
    $region39: #{dyrep_decoder_forward.1} parent=1 // pred_check_branch
      %293 = sbr.rel (0) target = $region41
    $region40: #{dyrep_decoder_forward.1} parent=1 // pred_region
      _
    $region41: #{dyrep_decoder_forward.1} parent=1 // pred_fallthru
      _
    // Predicated region
    $region42: #{dyrep_decoder_forward.1} parent=1 // pred_check
      _
    $region43: #{dyrep_decoder_forward.1} parent=1 // pred_check_branch
      %295 = sbr.rel (0) target = $region45
    $region44: #{dyrep_decoder_forward.1} parent=1 // pred_region
      _
    $region45: #{dyrep_decoder_forward.1} parent=1 // pred_fallthru
      _
    %296 = vsyncpa [#allocation4], 1

</llo_original>
